<compile_context>
chip_gen: v7x
topology: tpu7x:2x2x1
jax: 0.10.0
libtpu: 0.0.40
codegen_flags: <defaults>
</compile_context>

<pallas_src>
import functools

import jax
import jax.numpy as jnp
from jax.experimental import pallas as pl
from jax.experimental.pallas import tpu as pltpu

_LANE = 128
_TN_FLOOR = 512                         # <512-lane tiles only reach ~30% of HBM roofline
_MAX_TN = 32768                         # cap on lane-tile width (compile-time bound)


def _vmem_capacity_bytes():
    try:
        return int(pltpu.get_tpu_info().vmem_capacity_bytes)
    except Exception:
        return 64 * 1024 * 1024         # conservative fallback (v7x per-core VMEM)


def _rce_kernel(logits_ref, target_ref, ce_ref, num_ref, den_ref,
                ce_acc, num_acc, den_acc, *,
                ignore_index, num_classes, n_total, tiles_per_slice, tn,
                needs_mask, first_masked_tile):
    s = pl.program_id(0)      # parallel slice (TensorCore on v7x)
    t = pl.program_id(1)      # streamed tile within the slice

    @pl.when(t == 0)
    def _init():
        ce_acc[...] = jnp.zeros_like(ce_acc)
        num_acc[...] = jnp.zeros_like(num_acc)
        den_acc[...] = jnp.zeros_like(den_acc)

    def _accumulate(masked_tile):
        x = logits_ref[...]                                   # (B, C, TN) native dtype
        tgt = target_ref[...]                                 # (B, TN) int32

        # log-softmax statistics over the class (sublane) axis.  max / subtract /
        # one-hot gather stay in the input dtype (packed bf16 on v6e/v7x); only
        # exp / sum / log run in f32.
        # NOTE: C not a multiple of 8 wastes padded-sublane VPU/EUP work — free
        # while HBM-bound (f32 v5e/v6e), measurable on v7x / bf16-v6e.
        m = jnp.max(x, axis=1, keepdims=True)                 # (B, 1, TN)
        z = (x - m).astype(jnp.float32)                       # (B, C, TN)
        lse = jnp.log(jnp.sum(jnp.exp(z), axis=1))            # (B, TN)

        # gather z[target] with a one-hot reduce; tiny (1, C, 1) iota broadcasts.
        cls = jax.lax.broadcasted_iota(jnp.int32, (1, num_classes, 1), 1)
        onehot = cls == tgt[:, None, :]                       # (B, C, TN)
        zt = jnp.sum(jnp.where(onehot, z, 0.0), axis=1)       # (B, TN) = logit_t - max

        neg_logp_t = lse - zt                                 # -log softmax[target]

        # TODO(synk): torch raises on out-of-range target indices; here they are
        # excluded from the CE term and from the "correct" count instead.
        hit = (tgt >= 0) & (tgt < num_classes)
        # TODO(synk): on exact logit ties torch argmax picks the lowest class
        # index; `>= 0` counts a tying target as correct (measure-zero for
        # float inputs).
        correct = hit & (zt >= 0.0)

        valid = None if ignore_index is None else (tgt != ignore_index)
        if masked_tile:   # ragged tail and/or phantom tile of the odd split
            col = (s * tiles_per_slice + t) * tn + jax.lax.broadcasted_iota(
                jnp.int32, tgt.shape, 1)
            inb = col < n_total
            hit = hit & inb
            valid = inb if valid is None else (valid & inb)

        ce_acc[...] += jnp.where(hit, neg_logp_t, 0.0)
        if valid is None:
            num_acc[...] += jnp.where(correct, 1.0, 0.0)
            den_acc[...] += 1.0                               # every lane valid
        else:
            valid_f = jnp.where(valid, 1.0, 0.0)              # one select feeds both
            num_acc[...] += jnp.where(correct, valid_f, 0.0)
            den_acc[...] += valid_f

    if needs_mask:
        is_edge = (s * tiles_per_slice + t) >= first_masked_tile

        @pl.when(is_edge)
        def _masked():
            _accumulate(True)

        @pl.when(jnp.logical_not(is_edge))
        def _fast():
            _accumulate(False)
    else:
        _accumulate(False)

    # One cross-lane reduction + narrow store per slice (not per tile).
    @pl.when(t == tiles_per_slice - 1)
    def _flush():
        ce_ref[...] = jnp.sum(ce_acc[...], axis=-1, keepdims=True)[None]
        num_ref[...] = jnp.sum(num_acc[...], axis=-1, keepdims=True)[None]
        den_ref[...] = jnp.sum(den_acc[...], axis=-1, keepdims=True)[None]


def recall_cross_entropy_loss(logits, target, ignore_index=None):
    """logits: (B, C, *spatial) float; target: (B, *spatial) int. Returns scalar."""
    B, C = logits.shape[0], logits.shape[1]
    N = 1
    for d in logits.shape[2:]:
        N *= d
    x = logits.reshape(B, C, N)                 # keep native dtype (bf16 stays bf16)
    tgt = target.reshape(B, N).astype(jnp.int32)
    itemsize = x.dtype.itemsize

    # --- generation-aware, lane-aligned spatial tile ---------------------------
    vmem_cap = _vmem_capacity_bytes()
    soft_cap = min(int(0.75 * vmem_cap), 100 * 1024 * 1024)   # scoped-VMEM target
    work_budget = soft_cap // 2                               # per-tile working set
    per_col = (2 * B * C * itemsize      # double-buffered logits stream
               + 2 * B * 4               # double-buffered targets
               + 5 * B * C * 4           # in-kernel f32 temps (z, exp, onehot, selects)
               + 3 * B * 4)              # lane-dense f32 scratch accumulators
    budget_tn = max(_LANE, (work_budget // per_col) // _LANE * _LANE)

    if N % _LANE == 0 or N < _LANE:
        cap_n = N                        # full-width or already lane-aligned
    else:
        cap_n = (N // _LANE) * _LANE     # lane-aligned tile + masked ragged tail
    TN = min(cap_n, _MAX_TN, max(budget_tn, _TN_FLOOR))
    # TODO(synk): vocab-scale C would need a class-axis tile with an online
    # log-softmax; this kernel holds the full class axis in VMEM.

    n_tiles = pl.cdiv(N, TN)
    S = 2 if n_tiles >= 2 else 1               # always split across both TCs (v7x)
    T = pl.cdiv(n_tiles, S)
    phantom = S * T > n_tiles                  # at most one; masked in-kernel
    ragged = (N % TN) != 0
    needs_mask = ragged or phantom
    first_masked_tile = n_tiles - 1 if ragged else n_tiles
    last_blk = n_tiles - 1

    if phantom:                                # clamp the phantom tile's DMA source
        logits_map = lambda s, t: (0, 0, jnp.minimum(s * T + t, last_blk))
        target_map = lambda s, t: (0, jnp.minimum(s * T + t, last_blk))
    else:
        logits_map = lambda s, t: (0, 0, s * T + t)
        target_map = lambda s, t: (0, s * T + t)

    kernel = functools.partial(
        _rce_kernel, ignore_index=ignore_index, num_classes=C, n_total=N,
        tiles_per_slice=T, tn=TN, needs_mask=needs_mask,
        first_masked_tile=first_masked_tile)

    part_shape = jax.ShapeDtypeStruct((S, B, 1), jnp.float32)
    out_block = pl.BlockSpec((1, B, 1), lambda s, t: (s, 0, 0))

    cost = pl.CostEstimate(
        flops=int(8 * B * C * N + 12 * B * N),
        transcendentals=int(B * C * N + B * N),
        bytes_accessed=int(B * C * N * itemsize + B * N * 4 + 3 * S * B * 4))

    ce_p, num_p, den_p = pl.pallas_call(
        kernel,
        out_shape=(part_shape, part_shape, part_shape),
        grid_spec=pltpu.PrefetchScalarGridSpec(
            num_scalar_prefetch=0,
            grid=(S, T),
            in_specs=[
                # TODO(synk): on v5e consider pipeline_mode=pl.Buffered(3) on the
                # logits spec and sweep (exposed DMA latency at ~0.8 TB/s HBM).
                pl.BlockSpec((B, C, TN), logits_map),
                pl.BlockSpec((B, TN), target_map),
            ],
            out_specs=[out_block, out_block, out_block],
            scratch_shapes=[pltpu.VMEM((B, TN), jnp.float32)] * 3,
        ),
        compiler_params=pltpu.CompilerParams(
            # If a v7x trace shows the S axis serializing, switch the first
            # entry to pltpu.CORE_PARALLEL.
            dimension_semantics=("parallel", "arbitrary"),
            vmem_limit_bytes=int(max(soft_cap, 32 * 1024 * 1024))),
        cost_estimate=cost,
    )(x, tgt)

    ce = jnp.sum(ce_p, axis=0)[:, 0]            # (B,) per-sample CE sums
    num = jnp.sum(num_p, axis=0)[:, 0]
    den = jnp.sum(den_p, axis=0)[:, 0]
    recall = jnp.where(den > 0.0, num / den, 0.0)
    return jnp.mean((1.0 - recall) * (ce / N))


def _reference(logits, target, ignore_index=None):
    """Pure-JAX reference of the PyTorch forward."""
    B, C = logits.shape[0], logits.shape[1]
    x = logits.reshape(B, C, -1).astype(jnp.float32)
    t = target.reshape(B, -1).astype(jnp.int32)
    logp = jax.nn.log_softmax(x, axis=1)
    logp_t = jnp.take_along_axis(logp, t[:, None, :], axis=1)[:, 0, :]
    ce = -jnp.mean(logp_t, axis=-1)
    pred = jnp.argmax(x, axis=1)
    if ignore_index is None:
        valid = jnp.ones(t.shape, bool)
    else:
        valid = t != ignore_index
    num = jnp.sum((pred == t) & valid, axis=-1).astype(jnp.float32)
    den = jnp.sum(valid, axis=-1).astype(jnp.float32)
    recall = jnp.where(den > 0, num / den, 0.0)
    return jnp.mean((1.0 - recall) * ce)


if __name__ == "__main__":
    key = jax.random.PRNGKey(0)
    k1, k2, k3, k4, k5, k6 = jax.random.split(key, 6)

    # Case 1: lane-aligned spatial size, no ignore_index (single tile).
    B, C, H, W = 2, 4, 16, 16
    logits = jax.random.normal(k1, (B, C, H, W), dtype=jnp.float32)
    target = jax.random.randint(k2, (B, H, W), 0, C, dtype=jnp.int32)
    loss = jax.block_until_ready(recall_cross_entropy_loss(logits, target))
    ref = _reference(logits, target)
    assert jnp.allclose(loss, ref, atol=1e-5, rtol=1e-5), (loss, ref)

    # Case 2: ragged spatial size (N % 128 != 0) with ignore_index —
    # exercises the masked ragged tail and the 2-slice grid.
    B2, C2, H2, W2 = 2, 4, 18, 18
    logits2 = jax.random.normal(k3, (B2, C2, H2, W2), dtype=jnp.float32)
    target2 = jax.random.randint(k4, (B2, H2, W2), 0, C2, dtype=jnp.int32)
    loss2 = jax.block_until_ready(
        recall_cross_entropy_loss(logits2, target2, ignore_index=0))
    ref2 = _reference(logits2, target2, ignore_index=0)
    assert jnp.allclose(loss2, ref2, atol=1e-5, rtol=1e-5), (loss2, ref2)

    # Case 3: odd tile count (3 tiles of 32768) — exercises the unconditional
    # 2-slice split, the clamped phantom tile, and multi-tile lane-dense
    # scratch accumulation with a single flush per slice.
    B3, C3, H3, W3 = 2, 4, 256, 384
    logits3 = jax.random.normal(k5, (B3, C3, H3, W3), dtype=jnp.float32)
    target3 = jax.random.randint(k6, (B3, H3, W3), 0, C3, dtype=jnp.int32)
    loss3 = jax.block_until_ready(
        recall_cross_entropy_loss(logits3, target3, ignore_index=1))
    ref3 = _reference(logits3, target3, ignore_index=1)
    assert jnp.allclose(loss3, ref3, atol=1e-4, rtol=1e-4), (loss3, ref3)

    print("KERNEL_OK")
</pallas_src>

<mosaic_0001>
module attributes {stable_mosaic.version = 11 : i64} {
  func.func @_rce_kernel(%arg0: i32, %arg1: i32, %arg2: memref<2x4x256xf32, #tpu.memory_space<vmem>>, %arg3: memref<2x256xi32, #tpu.memory_space<vmem>>, %arg4: memref<1x2x1xf32, #tpu.memory_space<vmem>>, %arg5: memref<1x2x1xf32, #tpu.memory_space<vmem>>, %arg6: memref<1x2x1xf32, #tpu.memory_space<vmem>>, %arg7: memref<2x256xf32, #tpu.memory_space<vmem>>, %arg8: memref<2x256xf32, #tpu.memory_space<vmem>>, %arg9: memref<2x256xf32, #tpu.memory_space<vmem>>) attributes {dimension_semantics = [#tpu.dimension_semantics<parallel>, #tpu.dimension_semantics<arbitrary>], iteration_bounds = array<i64: 1, 1>, scalar_prefetch = 0 : i64, scratch_operands = 3 : i64, tpu.core_type = #tpu.core_type<tc>, window_params = [{transform_indices = @transform_0, window_bounds = array<i64: 2, 4, 256>}, {transform_indices = @transform_1, window_bounds = array<i64: 2, 256>}, {transform_indices = @transform_2, window_bounds = array<i64: 1, 2, 1>}, {transform_indices = @transform_3, window_bounds = array<i64: 1, 2, 1>}, {transform_indices = @transform_4, window_bounds = array<i64: 1, 2, 1>}]} {
    %c0_i32 = arith.constant 0 : i32
    %0 = arith.cmpi eq, %arg1, %c0_i32 : i32
    %1 = arith.extui %0 : i1 to i32
    %c0_i32_0 = arith.constant 0 : i32
    %2 = arith.cmpi ne, %1, %c0_i32_0 : i32
    scf.if %2 {
      %cst_28 = arith.constant 0.000000e+00 : f32
      %47 = vector.broadcast %cst_28 : f32 to vector<2x256xf32>
      %c0_29 = arith.constant 0 : index
      %c0_30 = arith.constant 0 : index
      %48 = vector.load %arg7[%c0_29, %c0_30] : memref<2x256xf32, #tpu.memory_space<vmem>>, vector<2x256xf32>
      tpu.vector_store %arg7[%c0_29, %c0_30], %47 {strides = array<i32>} : memref<2x256xf32, #tpu.memory_space<vmem>>, vector<2x256xf32>,
      %cst_31 = arith.constant 0.000000e+00 : f32
      %49 = vector.broadcast %cst_31 : f32 to vector<2x256xf32>
      %c0_32 = arith.constant 0 : index
      %c0_33 = arith.constant 0 : index
      %50 = vector.load %arg8[%c0_32, %c0_33] : memref<2x256xf32, #tpu.memory_space<vmem>>, vector<2x256xf32>
      tpu.vector_store %arg8[%c0_32, %c0_33], %49 {strides = array<i32>} : memref<2x256xf32, #tpu.memory_space<vmem>>, vector<2x256xf32>,
      %cst_34 = arith.constant 0.000000e+00 : f32
      %51 = vector.broadcast %cst_34 : f32 to vector<2x256xf32>
      %c0_35 = arith.constant 0 : index
      %c0_36 = arith.constant 0 : index
      %52 = vector.load %arg9[%c0_35, %c0_36] : memref<2x256xf32, #tpu.memory_space<vmem>>, vector<2x256xf32>
      tpu.vector_store %arg9[%c0_35, %c0_36], %51 {strides = array<i32>} : memref<2x256xf32, #tpu.memory_space<vmem>>, vector<2x256xf32>,
    } else {
    }
    %c0 = arith.constant 0 : index
    %c0_1 = arith.constant 0 : index
    %c0_2 = arith.constant 0 : index
    %3 = vector.load %arg2[%c0, %c0_1, %c0_2] : memref<2x4x256xf32, #tpu.memory_space<vmem>>, vector<2x4x256xf32>
    %c0_3 = arith.constant 0 : index
    %c0_4 = arith.constant 0 : index
    %4 = vector.load %arg3[%c0_3, %c0_4] : memref<2x256xi32, #tpu.memory_space<vmem>>, vector<2x256xi32>
    %cst = arith.constant dense<0xFF800000> : vector<2x256xf32>
    %5 = vector.multi_reduction <maximumf>, %3, %cst [1] : vector<2x4x256xf32> to vector<2x256xf32>
    %6 = vector.shape_cast %5 : vector<2x256xf32> to vector<2x1x256xf32>
    %7 = vector.broadcast %6 : vector<2x1x256xf32> to vector<2x4x256xf32>
    %8 = arith.subf %3, %7 : vector<2x4x256xf32>
    %9 = math.exp %8 : vector<2x4x256xf32>
    %cst_5 = arith.constant dense<0.000000e+00> : vector<2x256xf32>
    %10 = vector.multi_reduction <add>, %9, %cst_5 [1] : vector<2x4x256xf32> to vector<2x256xf32>
    %11 = math.log %10 : vector<2x256xf32>
    %12 = tpu.iota {dimensions = array<i32: 1>} : vector<1x4x1xi32>
    %13 = vector.shape_cast %4 : vector<2x256xi32> to vector<2x1x256xi32>
    %14 = vector.broadcast %12 : vector<1x4x1xi32> to vector<2x4x256xi32>
    %15 = vector.broadcast %13 : vector<2x1x256xi32> to vector<2x4x256xi32>
    %16 = arith.cmpi eq, %14, %15 : vector<2x4x256xi32>
    %cst_6 = arith.constant 0.000000e+00 : f32
    %17 = vector.broadcast %cst_6 : f32 to vector<2x4x256xf32>
    %18 = arith.select %16, %8, %17 : vector<2x4x256xi1>, vector<2x4x256xf32>
    %cst_7 = arith.constant dense<0.000000e+00> : vector<2x256xf32>
    %19 = vector.multi_reduction <add>, %18, %cst_7 [1] : vector<2x4x256xf32> to vector<2x256xf32>
    %20 = arith.subf %11, %19 : vector<2x256xf32>
    %c0_i32_8 = arith.constant 0 : i32
    %21 = vector.broadcast %c0_i32_8 : i32 to vector<2x256xi32>
    %22 = arith.cmpi sge, %4, %21 : vector<2x256xi32>
    %c4_i32 = arith.constant 4 : i32
    %23 = vector.broadcast %c4_i32 : i32 to vector<2x256xi32>
    %24 = arith.cmpi slt, %4, %23 : vector<2x256xi32>
    %25 = arith.andi %22, %24 : vector<2x256xi1>
    %cst_9 = arith.constant 0.000000e+00 : f32
    %26 = vector.broadcast %cst_9 : f32 to vector<2x256xf32>
    %27 = arith.cmpf oge, %19, %26 : vector<2x256xf32>
    %28 = arith.andi %25, %27 : vector<2x256xi1>
    %c0_10 = arith.constant 0 : index
    %c0_11 = arith.constant 0 : index
    %29 = vector.load %arg7[%c0_10, %c0_11] : memref<2x256xf32, #tpu.memory_space<vmem>>, vector<2x256xf32>
    %cst_12 = arith.constant 0.000000e+00 : f32
    %30 = vector.broadcast %cst_12 : f32 to vector<2x256xf32>
    %31 = arith.select %25, %20, %30 : vector<2x256xi1>, vector<2x256xf32>
    %32 = arith.addf %29, %31 : vector<2x256xf32>
    %c0_13 = arith.constant 0 : index
    %c0_14 = arith.constant 0 : index
    %33 = vector.load %arg7[%c0_13, %c0_14] : memref<2x256xf32, #tpu.memory_space<vmem>>, vector<2x256xf32>
    tpu.vector_store %arg7[%c0_13, %c0_14], %32 {strides = array<i32>} : memref<2x256xf32, #tpu.memory_space<vmem>>, vector<2x256xf32>,
    %c0_15 = arith.constant 0 : index
    %c0_16 = arith.constant 0 : index
    %34 = vector.load %arg8[%c0_15, %c0_16] : memref<2x256xf32, #tpu.memory_space<vmem>>, vector<2x256xf32>
    %cst_17 = arith.constant 1.000000e+00 : f32
    %cst_18 = arith.constant 0.000000e+00 : f32
    %35 = vector.broadcast %cst_17 : f32 to vector<2x256xf32>
    %36 = vector.broadcast %cst_18 : f32 to vector<2x256xf32>
    %37 = arith.select %28, %35, %36 : vector<2x256xi1>, vector<2x256xf32>
    %38 = arith.addf %34, %37 : vector<2x256xf32>
    %c0_19 = arith.constant 0 : index
    %c0_20 = arith.constant 0 : index
    %39 = vector.load %arg8[%c0_19, %c0_20] : memref<2x256xf32, #tpu.memory_space<vmem>>, vector<2x256xf32>
    tpu.vector_store %arg8[%c0_19, %c0_20], %38 {strides = array<i32>} : memref<2x256xf32, #tpu.memory_space<vmem>>, vector<2x256xf32>,
    %c0_21 = arith.constant 0 : index
    %c0_22 = arith.constant 0 : index
    %40 = vector.load %arg9[%c0_21, %c0_22] : memref<2x256xf32, #tpu.memory_space<vmem>>, vector<2x256xf32>
    %cst_23 = arith.constant 1.000000e+00 : f32
    %41 = vector.broadcast %cst_23 : f32 to vector<2x256xf32>
    %42 = arith.addf %40, %41 : vector<2x256xf32>
    %c0_24 = arith.constant 0 : index
    %c0_25 = arith.constant 0 : index
    %43 = vector.load %arg9[%c0_24, %c0_25] : memref<2x256xf32, #tpu.memory_space<vmem>>, vector<2x256xf32>
    tpu.vector_store %arg9[%c0_24, %c0_25], %42 {strides = array<i32>} : memref<2x256xf32, #tpu.memory_space<vmem>>, vector<2x256xf32>,
    %c0_i32_26 = arith.constant 0 : i32
    %44 = arith.cmpi eq, %arg1, %c0_i32_26 : i32
    %45 = arith.extui %44 : i1 to i32
    %c0_i32_27 = arith.constant 0 : i32
    %46 = arith.cmpi ne, %45, %c0_i32_27 : i32
    scf.if %46 {
      %c0_28 = arith.constant 0 : index
      %c0_29 = arith.constant 0 : index
      %47 = vector.load %arg7[%c0_28, %c0_29] : memref<2x256xf32, #tpu.memory_space<vmem>>, vector<2x256xf32>
      %cst_30 = arith.constant dense<0.000000e+00> : vector<2xf32>
      %48 = vector.multi_reduction <add>, %47, %cst_30 [1] : vector<2x256xf32> to vector<2xf32>
      %49 = vector.shape_cast %48 : vector<2xf32> to vector<2x1xf32>
      %50 = vector.shape_cast %49 : vector<2x1xf32> to vector<1x2x1xf32>
      %c0_31 = arith.constant 0 : index
      %c0_32 = arith.constant 0 : index
      %c0_33 = arith.constant 0 : index
      %51 = vector.load %arg4[%c0_31, %c0_32, %c0_33] : memref<1x2x1xf32, #tpu.memory_space<vmem>>, vector<1x2x1xf32>
      tpu.vector_store %arg4[%c0_31, %c0_32, %c0_33], %50 {strides = array<i32>} : memref<1x2x1xf32, #tpu.memory_space<vmem>>, vector<1x2x1xf32>,
      %c0_34 = arith.constant 0 : index
      %c0_35 = arith.constant 0 : index
      %52 = vector.load %arg8[%c0_34, %c0_35] : memref<2x256xf32, #tpu.memory_space<vmem>>, vector<2x256xf32>
      %cst_36 = arith.constant dense<0.000000e+00> : vector<2xf32>
      %53 = vector.multi_reduction <add>, %52, %cst_36 [1] : vector<2x256xf32> to vector<2xf32>
      %54 = vector.shape_cast %53 : vector<2xf32> to vector<2x1xf32>
      %55 = vector.shape_cast %54 : vector<2x1xf32> to vector<1x2x1xf32>
      %c0_37 = arith.constant 0 : index
      %c0_38 = arith.constant 0 : index
      %c0_39 = arith.constant 0 : index
      %56 = vector.load %arg5[%c0_37, %c0_38, %c0_39] : memref<1x2x1xf32, #tpu.memory_space<vmem>>, vector<1x2x1xf32>
      tpu.vector_store %arg5[%c0_37, %c0_38, %c0_39], %55 {strides = array<i32>} : memref<1x2x1xf32, #tpu.memory_space<vmem>>, vector<1x2x1xf32>,
      %c0_40 = arith.constant 0 : index
      %c0_41 = arith.constant 0 : index
      %57 = vector.load %arg9[%c0_40, %c0_41] : memref<2x256xf32, #tpu.memory_space<vmem>>, vector<2x256xf32>
      %cst_42 = arith.constant dense<0.000000e+00> : vector<2xf32>
      %58 = vector.multi_reduction <add>, %57, %cst_42 [1] : vector<2x256xf32> to vector<2xf32>
      %59 = vector.shape_cast %58 : vector<2xf32> to vector<2x1xf32>
      %60 = vector.shape_cast %59 : vector<2x1xf32> to vector<1x2x1xf32>
      %c0_43 = arith.constant 0 : index
      %c0_44 = arith.constant 0 : index
      %c0_45 = arith.constant 0 : index
      %61 = vector.load %arg6[%c0_43, %c0_44, %c0_45] : memref<1x2x1xf32, #tpu.memory_space<vmem>>, vector<1x2x1xf32>
      tpu.vector_store %arg6[%c0_43, %c0_44, %c0_45], %60 {strides = array<i32>} : memref<1x2x1xf32, #tpu.memory_space<vmem>>, vector<1x2x1xf32>,
    } else {
    }
    return
  }
  func.func @transform_0(%arg0: i32, %arg1: i32) -> (i32, i32, i32) {
    %c1_i32 = arith.constant 1 : i32
    %0 = arith.muli %arg0, %c1_i32 : i32
    %1 = arith.addi %0, %arg1 : i32
    %c0_i32 = arith.constant 0 : i32
    %c0_i32_0 = arith.constant 0 : i32
    %c0_i32_1 = arith.constant 0 : i32
    return %c0_i32, %c0_i32_0, %1 : i32, i32, i32
  }
  func.func @transform_1(%arg0: i32, %arg1: i32) -> (i32, i32) {
    %c1_i32 = arith.constant 1 : i32
    %0 = arith.muli %arg0, %c1_i32 : i32
    %1 = arith.addi %0, %arg1 : i32
    %c0_i32 = arith.constant 0 : i32
    %c0_i32_0 = arith.constant 0 : i32
    return %c0_i32, %1 : i32, i32
  }
  func.func @transform_2(%arg0: i32, %arg1: i32) -> (i32, i32, i32) {
    %c0_i32 = arith.constant 0 : i32
    %c0_i32_0 = arith.constant 0 : i32
    %c0_i32_1 = arith.constant 0 : i32
    return %arg0, %c0_i32, %c0_i32_0 : i32, i32, i32
  }
  func.func @transform_3(%arg0: i32, %arg1: i32) -> (i32, i32, i32) {
    %c0_i32 = arith.constant 0 : i32
    %c0_i32_0 = arith.constant 0 : i32
    %c0_i32_1 = arith.constant 0 : i32
    return %arg0, %c0_i32, %c0_i32_0 : i32, i32, i32
  }
  func.func @transform_4(%arg0: i32, %arg1: i32) -> (i32, i32, i32) {
    %c0_i32 = arith.constant 0 : i32
    %c0_i32_0 = arith.constant 0 : i32
    %c0_i32_1 = arith.constant 0 : i32
    return %arg0, %c0_i32, %c0_i32_0 : i32, i32, i32
  }
}

</mosaic_0001>

<llo_original>
// kernel: tpu_custom_call.1
$region0: #{tpu_custom_call.1}
  #allocation0 [shape = 'u32[]', space=smem, size = 0x4, offset = 0x4, fixed_abs, tag = 'smem constant byte address 0x4 - core index']
  #allocation1 [shape = 'u32[144,128]{1,0:T(1,128)}', space=vmem, size = 0x12000, scoped, tag = 'internal scratch']
  #allocation2 [shape = 'f32[2,256]{1,0:T(2,128)}', space=vmem, size = 0x800, scoped, tag = 'scratch operand']
  #allocation3 [shape = 'f32[2,256]{1,0:T(2,128)}', space=vmem, size = 0x800, scoped, tag = 'scratch operand']
  #allocation4 [shape = 'f32[2,256]{1,0:T(2,128)}', space=vmem, size = 0x800, scoped, tag = 'scratch operand']
  %s0 = inlined_call_operand.hbm [shape: f32[2,4,256], index: 0, kind: input, shape index: {}]
  %s1 = inlined_call_operand.hbm [shape: s32[2,256], index: 1, kind: input, shape index: {}]
  %s2 = inlined_call_operand.vmem [shape: f32[1,2,1], index: 2, kind: output, shape index: {0}]
  %s3 = inlined_call_operand.vmem [shape: f32[1,2,1], index: 3, kind: output, shape index: {1}]
  %s4 = inlined_call_operand.vmem [shape: f32[1,2,1], index: 4, kind: output, shape index: {2}]
  %5 = xla_tuple %s2, %s3, %s4
  %s6 = sld [smem:[#allocation0]]
  $region50: #{tpu_custom_call.1} parent=0
    _
  %s8 = ssub.s32 1, %s6
  %s9 = scalar_select 0, %s8, %s6
  $region1: #{tpu_custom_call.1} parent=0
    #allocation5 [shape = 'u8[8192]{0}', space=vmem, size = 0x2000, scoped, tag = 'input window, operand 0, single buffered']
    #allocation6 [shape = 's32[1]{0}', space=sflag, size = 0x4, scoped, tag = 'scoped memory for tpu_custom_call.1']
    #allocation7 [shape = 'u8[2048]{0}', space=vmem, size = 0x800, scoped, tag = 'input window, operand 1, single buffered']
    #allocation8 [shape = 's32[1]{0}', space=sflag, size = 0x4, scoped, tag = 'scoped memory for tpu_custom_call.1']
    %10 = vsyncpa [#allocation6], 0
    %11 = vsyncpa [#allocation8], 0
    // Predicated region
    $region2: #{tpu_custom_call.1} parent=1 // pred_check
      _
    $region3: #{tpu_custom_call.1} parent=1 // pred_check_branch
      %13 = sbr.rel (0) target = $region5
    $region4: #{tpu_custom_call.1} parent=1 // pred_region
      %s14 = sadd.s32 0, 0
      %s15 = smul.u32 2, %s14
      %s17 = ssub.s32 256, 256
      %18 = vsyncadd [#allocation6], %s17
      %s19 = smul.addr %s15, 64
      %s20 = scalar_lea.hbm %s0, %s19
      %s21 = sshll.u32 [#allocation5], 4
      %s22 = int_to_ptr.vmem [resolvable:$true] %s21
      %27 = dma.hbm_to_vmem [thread:$0]  %s20, 256, %s22, [#allocation6], 128, 128, 8
    $region5: #{tpu_custom_call.1} parent=1 // pred_fallthru
      _
    // Predicated region
    $region6: #{tpu_custom_call.1} parent=1 // pred_check
      _
    $region7: #{tpu_custom_call.1} parent=1 // pred_check_branch
      %29 = sbr.rel (0) target = $region9
    $region8: #{tpu_custom_call.1} parent=1 // pred_region
      %s30 = sadd.s32 0, 0
      %s31 = smul.u32 2, %s30
      %s33 = ssub.s32 64, 64
      %34 = vsyncadd [#allocation8], %s33
      %s35 = smul.addr %s31, 32
      %s36 = scalar_lea.hbm %s1, %s35
      %s38 = sshll.u32 [#allocation7], 4
      %s39 = int_to_ptr.vmem [resolvable:$true] %s38
      %41 = dma.hbm_to_vmem [thread:$0]  %s36, 64, %s39, [#allocation8]
    $region9: #{tpu_custom_call.1} parent=1 // pred_fallthru
      _
    // Predicated region
    $region10: #{tpu_custom_call.1} parent=1 // pred_check
      _
    $region11: #{tpu_custom_call.1} parent=1 // pred_check_branch
      %43 = sbr.rel (0) target = $region13
    $region12: #{tpu_custom_call.1} parent=1 // pred_region
      %44 = dma.done [#allocation6], 256
    $region13: #{tpu_custom_call.1} parent=1 // pred_fallthru
      _
    // Predicated region
    $region14: #{tpu_custom_call.1} parent=1 // pred_check
      _
    $region15: #{tpu_custom_call.1} parent=1 // pred_check_branch
      %46 = sbr.rel (0) target = $region17
    $region16: #{tpu_custom_call.1} parent=1 // pred_region
      %47 = dma.done [#allocation8], 64
    $region17: #{tpu_custom_call.1} parent=1 // pred_fallthru
      _
    %s48 = sadd.s32 0, 0
    %s49 = smul.u32 2, %s48
    %s50 = sadd.s32 0, 0
    %s51 = smul.u32 2, %s50
    %p52 = scmp.eq.s32.totalorder 0, 0
    // Predicated region
    $region18: #{tpu_custom_call.1} parent=1 // pred_check
      %p53 = pneg %p52
    $region19: #{tpu_custom_call.1} parent=1 // pred_check_branch
      %55 = sbr.rel (%p53) target = $region21
    $region20: #{tpu_custom_call.1} parent=1 // pred_region
      %56 = vst [vmem:[#allocation2] sm:$0xf] 0.0
      %57 = vst [vmem:[#allocation3] sm:$0xf] 0.0
      %58 = vst [vmem:[#allocation4] sm:$0xf] 0.0
    $region21: #{tpu_custom_call.1} parent=1 // pred_fallthru
      _
    %v59 = vld [vmem:[#allocation5] sm:$0xff]
    %v60 = vld [vmem:[#allocation5 + $0x8] sm:$0xff]
    %v61 = vld [vmem:[#allocation7] sm:$0xf]
    %v64 = vcombine.high %v59, %v59
    %v65 = vcombine.high %v60, %v60
    %vm68 = vcmask 1043456
    %v69 = vsel %vm68, %v59, -inf
    %v70 = vrot.slane %v69, 4
    %v71 = vmax.f32 %v69, %v70
    %v72 = vrot.slane %v71, 2
    %v73 = vmax.f32 %v71, %v72
    %v74 = vrot.slane %v73, 1
    %v75 = vmax.f32 %v73, %v74
    %v76 = vsel %vm68, %v64, -inf
    %v77 = vrot.slane %v76, 4
    %v78 = vmax.f32 %v76, %v77
    %v79 = vrot.slane %v78, 2
    %v80 = vmax.f32 %v78, %v79
    %v81 = vrot.slane %v80, 1
    %v82 = vmax.f32 %v80, %v81
    %v83 = vsel %vm68, %v60, -inf
    %v84 = vrot.slane %v83, 4
    %v85 = vmax.f32 %v83, %v84
    %v86 = vrot.slane %v85, 2
    %v87 = vmax.f32 %v85, %v86
    %v88 = vrot.slane %v87, 1
    %v89 = vmax.f32 %v87, %v88
    %v90 = vsel %vm68, %v65, -inf
    %v91 = vrot.slane %v90, 4
    %v92 = vmax.f32 %v90, %v91
    %v93 = vrot.slane %v92, 2
    %v94 = vmax.f32 %v92, %v93
    %v95 = vrot.slane %v94, 1
    %v96 = vmax.f32 %v94, %v95
    %v101 = vcombine.low %v75, %v82
    %v102 = vcombine.low %v89, %v96
    %v105 = vsub.f32 %v59, %v101
    %v106 = vsub.f32 %v60, %v102
    %v107 = vmul.f32 %v105, 1.442695
    %v108 = vpow.pop %v107
    %v109 = vmul.f32 %v106, 1.442695
    %v110 = vpow.pop %v109
    %v113 = vcombine.high %v108, %v108
    %v114 = vcombine.high %v110, %v110
    %v117 = vsel %vm68, %v108, 0.0
    %v118 = vrot.slane %v117, 4
    %v119 = vadd.f32 %v117, %v118
    %v120 = vrot.slane %v119, 2
    %v121 = vadd.f32 %v119, %v120
    %v122 = vrot.slane %v121, 1
    %v123 = vadd.f32 %v121, %v122
    %v124 = vsel %vm68, %v113, 0.0
    %v125 = vrot.slane %v124, 4
    %v126 = vadd.f32 %v124, %v125
    %v127 = vrot.slane %v126, 2
    %v128 = vadd.f32 %v126, %v127
    %v129 = vrot.slane %v128, 1
    %v130 = vadd.f32 %v128, %v129
    %v131 = vsel %vm68, %v110, 0.0
    %v132 = vrot.slane %v131, 4
    %v133 = vadd.f32 %v131, %v132
    %v134 = vrot.slane %v133, 2
    %v135 = vadd.f32 %v133, %v134
    %v136 = vrot.slane %v135, 1
    %v137 = vadd.f32 %v135, %v136
    %v138 = vsel %vm68, %v114, 0.0
    %v139 = vrot.slane %v138, 4
    %v140 = vadd.f32 %v138, %v139
    %v141 = vrot.slane %v140, 2
    %v142 = vadd.f32 %v140, %v141
    %v143 = vrot.slane %v142, 1
    %v144 = vadd.f32 %v142, %v143
    %v145 = vlog2.pop %v123
    %v146 = vmul.f32 %v145, 0.6931472
    %v147 = vlog2.pop %v130
    %v148 = vmul.f32 %v147, 0.6931472
    %v149 = vlog2.pop %v137
    %v150 = vmul.f32 %v149, 0.6931472
    %v151 = vlog2.pop %v144
    %v152 = vmul.f32 %v151, 0.6931472
    %v153 = vlaneseq
    %v154 = vshrl.u32 %v153, 7
    %v156 = vunpack.c.l.s4 1966171168
    %v157 = vunpack.c.0.s8 %v156
    %v158 = vlaneseq
    %v159 = vshrl.u32 %v158, 7
    %v160 = vsub.s32 %v157, %v159
    %v161 = vrot.slane %v61, %v160
    %v162 = vcombine.high %v161, %v161
    %v163 = vlaneseq
    %v164 = vshrl.u32 %v163, 7
    %v165 = vsub.s32 0, %v164
    %v166 = vrot.slane %v161, %v165
    %v167 = vlaneseq
    %v168 = vshrl.u32 %v167, 7
    %v169 = vsub.s32 1, %v168
    %v170 = vrot.slane %v161, %v169
    %v171 = vlaneseq
    %v172 = vshrl.u32 %v171, 7
    %v173 = vsub.s32 0, %v172
    %v174 = vrot.slane %v162, %v173
    %v175 = vlaneseq
    %v176 = vshrl.u32 %v175, 7
    %v177 = vsub.s32 1, %v176
    %v178 = vrot.slane %v162, %v177
    %vm179 = vcmp.eq.s32.totalorder %v154, %v166
    %vm180 = vcmp.eq.s32.totalorder %v154, %v170
    %vm181 = vcmp.eq.s32.totalorder %v154, %v174
    %vm182 = vcmp.eq.s32.totalorder %v154, %v178
    %v185 = vcombine.high %v105, %v105
    %v186 = vcombine.high %v106, %v106
    %v189 = vsel %vm179, %v105, 0.0
    %v190 = vsel %vm180, %v185, 0.0
    %v191 = vsel %vm181, %v106, 0.0
    %v192 = vsel %vm182, %v186, 0.0
    %v193 = vsel %vm68, %v189, 0.0
    %v194 = vrot.slane %v193, 4
    %v195 = vadd.f32 %v193, %v194
    %v196 = vrot.slane %v195, 2
    %v197 = vadd.f32 %v195, %v196
    %v198 = vrot.slane %v197, 1
    %v199 = vadd.f32 %v197, %v198
    %v200 = vsel %vm68, %v190, 0.0
    %v201 = vrot.slane %v200, 4
    %v202 = vadd.f32 %v200, %v201
    %v203 = vrot.slane %v202, 2
    %v204 = vadd.f32 %v202, %v203
    %v205 = vrot.slane %v204, 1
    %v206 = vadd.f32 %v204, %v205
    %v207 = vsel %vm68, %v191, 0.0
    %v208 = vrot.slane %v207, 4
    %v209 = vadd.f32 %v207, %v208
    %v210 = vrot.slane %v209, 2
    %v211 = vadd.f32 %v209, %v210
    %v212 = vrot.slane %v211, 1
    %v213 = vadd.f32 %v211, %v212
    %v214 = vsel %vm68, %v192, 0.0
    %v215 = vrot.slane %v214, 4
    %v216 = vadd.f32 %v214, %v215
    %v217 = vrot.slane %v216, 2
    %v218 = vadd.f32 %v216, %v217
    %v219 = vrot.slane %v218, 1
    %v220 = vadd.f32 %v218, %v219
    %v221 = vsub.f32 %v146, %v199
    %v222 = vsub.f32 %v148, %v206
    %v223 = vsub.f32 %v150, %v213
    %v224 = vsub.f32 %v152, %v220
    %vm225 = vcmp.ge.s32.totalorder %v61, 0
    %vm226 = vcmp.lt.s32.totalorder %v61, 4
    %vm227 = vmand %vm225, %vm226
    %vm228 = vcmp.ge.f32.partialorder %v199, 0.0
    %vm229 = vcmp.ge.f32.partialorder %v206, 0.0
    %vm230 = vcmp.ge.f32.partialorder %v213, 0.0
    %vm231 = vcmp.ge.f32.partialorder %v220, 0.0
    %v232 = vsel %vm228, 1, 0
    %v233 = vsel %vm229, 1, 0
    %v234 = vsel %vm230, 1, 0
    %v235 = vsel %vm231, 1, 0
    %v236 = vcombine.low %v232, %v233
    %v238 = vunpack.c.l.s4 1983009808
    %v239 = vunpack.c.0.s8 %v238
    %v240 = vlaneseq
    %v241 = vshrl.u32 %v240, 7
    %v242 = vsub.s32 %v239, %v241
    %v243 = vrot.slane %v236, %v242
    %v244 = vcombine.low %v234, %v235
    %v246 = vunpack.c.l.s4 1983009808
    %v247 = vunpack.c.0.s8 %v246
    %v248 = vlaneseq
    %v249 = vshrl.u32 %v248, 7
    %v250 = vsub.s32 %v247, %v249
    %v251 = vrot.slane %v244, %v250
    %vm252 = vcmask 1044484
    %v253 = vsel %vm252, %v243, %v243
    %vm254 = vcmask 1046534
    %v255 = vsel %vm254, %v243, %v253
    %v256 = vrot.slane %v251, 7
    %vm257 = vcmask 1041409
    %v258 = vsel %vm257, %v256, %v255
    %vm259 = vcmask 1043459
    %v260 = vsel %vm259, %v256, %v258
    %vm261 = vcmask 1045509
    %v262 = vsel %vm261, %v256, %v260
    %vm263 = vcmask 1047559
    %v264 = vsel %vm263, %v256, %v262
    %vm265 = vcmp.ne.s32.totalorder %v264, 0
    %vm266 = vmand %vm227, %vm265
    %v267 = vld [vmem:[#allocation2] sm:$0xf]
    %v272 = vcombine.low %v221, %v222
    %v274 = vunpack.c.l.s4 1983009808
    %v275 = vunpack.c.0.s8 %v274
    %v276 = vlaneseq
    %v277 = vshrl.u32 %v276, 7
    %v278 = vsub.s32 %v275, %v277
    %v279 = vrot.slane %v272, %v278
    %v280 = vcombine.low %v223, %v224
    %v282 = vunpack.c.l.s4 1983009808
    %v283 = vunpack.c.0.s8 %v282
    %v284 = vlaneseq
    %v285 = vshrl.u32 %v284, 7
    %v286 = vsub.s32 %v283, %v285
    %v287 = vrot.slane %v280, %v286
    %v288 = vsel %vm252, %v279, %v279
    %v289 = vsel %vm254, %v279, %v288
    %v290 = vrot.slane %v287, 7
    %v291 = vsel %vm257, %v290, %v289
    %v292 = vsel %vm259, %v290, %v291
    %v293 = vsel %vm261, %v290, %v292
    %v294 = vsel %vm263, %v290, %v293
    %v296 = vsel %vm227, %v294, 0.0
    %v297 = vadd.f32 %v267, %v296
    %298 = vst [vmem:[#allocation2] sm:$0xf] %v297
    %v299 = vld [vmem:[#allocation3] sm:$0xf]
    %v300 = vsel %vm266, 1.0, 0.0
    %v301 = vadd.f32 %v299, %v300
    %302 = vst [vmem:[#allocation3] sm:$0xf] %v301
    %v303 = vld [vmem:[#allocation4] sm:$0xf]
    %v304 = vadd.f32 %v303, 1.0
    %305 = vst [vmem:[#allocation4] sm:$0xf] %v304
    // Predicated region
    $region22: #{tpu_custom_call.1} parent=1 // pred_check
      %p306 = pneg %p52
    $region23: #{tpu_custom_call.1} parent=1 // pred_check_branch
      %308 = sbr.rel (%p306) target = $region25
    $region24: #{tpu_custom_call.1} parent=1 // pred_region
      %v309 = vld [vmem:[#allocation2] sm:$0xf]
      %v312 = vunpack.c.l.s4 1983009808
      %v313 = vunpack.c.0.s8 %v312
      %v314 = vlaneseq
      %v315 = vshrl.u32 %v314, 7
      %v316 = vsub.s32 %v313, %v315
      %v317 = vrot.slane %v309, %v316
      %v318 = vcombine.high %v317, %v317
      %vm321 = vcmask 1041408
      %v322 = vsel %vm321, %v317, 0.0
      %v323 = vsel %vm321, %v318, 0.0
      %v324 = vadd.f32 %v322, %v323
      %325 = vadd.xlane.f32.xlu0 %v324
      %v326 = vpop.xlane.xlu0 %325
      %vm327 = vcmask 1024
      %328 = vst.msk [vmem:[%s2] sm:$0x3] %vm327, %v326
      %v329 = vld [vmem:[#allocation3] sm:$0xf]
      %v332 = vunpack.c.l.s4 1983009808
      %v333 = vunpack.c.0.s8 %v332
      %v334 = vlaneseq
      %v335 = vshrl.u32 %v334, 7
      %v336 = vsub.s32 %v333, %v335
      %v337 = vrot.slane %v329, %v336
      %v338 = vcombine.high %v337, %v337
      %v341 = vsel %vm321, %v337, 0.0
      %v342 = vsel %vm321, %v338, 0.0
      %v343 = vadd.f32 %v341, %v342
      %344 = vadd.xlane.f32.xlu0 %v343
      %v345 = vpop.xlane.xlu0 %344
      %346 = vst.msk [vmem:[%s3] sm:$0x3] %vm327, %v345
      %v347 = vld [vmem:[#allocation4] sm:$0xf]
      %v350 = vunpack.c.l.s4 1983009808
      %v351 = vunpack.c.0.s8 %v350
      %v352 = vlaneseq
      %v353 = vshrl.u32 %v352, 7
      %v354 = vsub.s32 %v351, %v353
      %v355 = vrot.slane %v347, %v354
      %v356 = vcombine.high %v355, %v355
      %v359 = vsel %vm321, %v355, 0.0
      %v360 = vsel %vm321, %v356, 0.0
      %v361 = vadd.f32 %v359, %v360
      %362 = vadd.xlane.f32.xlu0 %v361
      %v363 = vpop.xlane.xlu0 %362
      %364 = vst.msk [vmem:[%s4] sm:$0x3] %vm327, %v363
    $region25: #{tpu_custom_call.1} parent=1 // pred_fallthru
      _
    // Predicated region
    $region26: #{tpu_custom_call.1} parent=1 // pred_check
      _
    $region27: #{tpu_custom_call.1} parent=1 // pred_check_branch
      %366 = sbr.rel (0) target = $region29
    $region28: #{tpu_custom_call.1} parent=1 // pred_region
      _
    $region29: #{tpu_custom_call.1} parent=1 // pred_fallthru
      _
    // Predicated region
    $region30: #{tpu_custom_call.1} parent=1 // pred_check
      _
    $region31: #{tpu_custom_call.1} parent=1 // pred_check_branch
      %368 = sbr.rel (0) target = $region33
    $region32: #{tpu_custom_call.1} parent=1 // pred_region
      _
    $region33: #{tpu_custom_call.1} parent=1 // pred_fallthru
      _
    // Predicated region
    $region34: #{tpu_custom_call.1} parent=1 // pred_check
      _
    $region35: #{tpu_custom_call.1} parent=1 // pred_check_branch
      %370 = sbr.rel (0) target = $region37
    $region36: #{tpu_custom_call.1} parent=1 // pred_region
      _
    $region37: #{tpu_custom_call.1} parent=1 // pred_fallthru
      _
    // Predicated region
    $region38: #{tpu_custom_call.1} parent=1 // pred_check
      _
    $region39: #{tpu_custom_call.1} parent=1 // pred_check_branch
      %372 = sbr.rel (0) target = $region41
    $region40: #{tpu_custom_call.1} parent=1 // pred_region
      _
    $region41: #{tpu_custom_call.1} parent=1 // pred_fallthru
      _
    // Predicated region
    $region42: #{tpu_custom_call.1} parent=1 // pred_check
      _
    $region43: #{tpu_custom_call.1} parent=1 // pred_check_branch
      %374 = sbr.rel (0) target = $region45
    $region44: #{tpu_custom_call.1} parent=1 // pred_region
      _
    $region45: #{tpu_custom_call.1} parent=1 // pred_fallthru
      _
    // Predicated region
    $region46: #{tpu_custom_call.1} parent=1 // pred_check
      _
    $region47: #{tpu_custom_call.1} parent=1 // pred_check_branch
      %376 = sbr.rel (0) target = $region49
    $region48: #{tpu_custom_call.1} parent=1 // pred_region
      _
    $region49: #{tpu_custom_call.1} parent=1 // pred_fallthru
      _
    %377 = vsyncpa [#allocation6], 1
    %378 = vsyncpa [#allocation8], 1

</llo_original>
